<compile_context>
chip_gen: v6e
topology: v6e:2x2x1
jax: 0.10.0
libtpu: 0.0.40
codegen_flags: <defaults>
</compile_context>

<pallas_src>
import math

import jax
import jax.numpy as jnp
from jax.experimental import pallas as pl
from jax.experimental.pallas import tpu as pltpu

# ----------------------- model dims (module defaults) -----------------------------------
B = 2          # batch_size
S = 8          # enc_seq_len
F = 6          # raw input features (module arg `input_size`)
K = 2          # time_embd (K-1 periodic features + 1 linear feature)
D = 32         # dim_val
A = 16         # dim_attn
N = B * S      # merged row count: whole batch handled in one grid step

# ----------------------- packed parameter slab (single bf16 DMA) ------------------------
# Every parameter sits at a static, 8-aligned row offset of ONE (SLAB_ROWS, 128) bf16 slab;
# the kernel reads it with static ref slices (lane offset always 0).
ROW_WXT  = 0      # (F, D+1) enc_input_fc x-rows (linear Time2Vec branch folded in) || wt
ROW_VEC  = 8      # (16, D)  single-row parameters (see VR_*)
ROW_WMV  = 24     # (D, 2D)  [ (Wq/sqrt(A))Wk^T  ||  Wv@Wh ]  -> one matmul, two lane slices
ROW_WFC2 = 56     # (D, D)
ROW_WFC1 = 88     # (D, D)
ROW_WOUT = 120    # (N, D)   out_fc weight, (1, S*D) reshaped row-major and tiled over batch
ROW_SEL  = 136    # (N, B)   one-hot batch selector for the output-head sublane collapse
ROW_MASK = 152    # (N, N)   additive block-diagonal attention mask (0 / -1e9)
SLAB_ROWS, SLAB_COLS = 168, 128

VR_BT   = 0       # cols 0:1  Time2Vec periodic bias
VR_WES  = 1       # cols 0:D  enc_input_fc row hit by the periodic feature
VR_BE   = 2       # cols 0:D  enc_input_fc bias (linear branch folded in)
VR_G1, VR_B1     = 3, 4
VR_BFC2, VR_BFC1 = 5, 6
VR_G2, VR_B2     = 7, 8
VR_BOUT = 9       # cols 0:1  out_fc bias


# ------------------------------------ Pallas kernel -------------------------------------
def _transformer_kernel(x_ref, slab_ref, o_ref):
    f32 = jnp.float32
    bf16 = jnp.bfloat16

    def mx(a, b, dims=None):
        # operands are already bf16 (native single-pass MXU path), f32 accumulation.
        if dims is None:
            return jnp.dot(a, b, preferred_element_type=f32)
        return jax.lax.dot_general(a, b, dims, preferred_element_type=f32)

    x = x_ref[...]                                               # (N, F) f32

    # ---- parameters: static slices of the single packed bf16 slab ----------------------
    wxt   = slab_ref[ROW_WXT:ROW_WXT + F, 0:D + 1]               # (F, D+1)
    wmv   = slab_ref[ROW_WMV:ROW_WMV + D, 0:2 * D]               # (D, 2D)
    wfc2  = slab_ref[ROW_WFC2:ROW_WFC2 + D, 0:D]
    wfc1  = slab_ref[ROW_WFC1:ROW_WFC1 + D, 0:D]
    wout  = slab_ref[ROW_WOUT:ROW_WOUT + N, 0:D]                 # pre-tiled (N, D)
    sel   = slab_ref[ROW_SEL:ROW_SEL + N, 0:B]                   # (N, B) one-hot
    amask = slab_ref[ROW_MASK:ROW_MASK + N, 0:N]                 # bf16, promotes on add

    vrow = lambda r, c=D: slab_ref[ROW_VEC + r:ROW_VEC + r + 1, 0:c]
    bt = vrow(VR_BT, 1)
    wes, be = vrow(VR_WES), vrow(VR_BE)
    g1, bb1 = vrow(VR_G1), vrow(VR_B1)
    bfc2, bfc1 = vrow(VR_BFC2), vrow(VR_BFC1)
    g2, bb2 = vrow(VR_G2), vrow(VR_B2)
    bout = vrow(VR_BOUT, 1)

    # ---- Time2Vec + enc_input_fc: ONE (N,F)@(F,D+1) matmul -----------------------------
    # Linear Time2Vec branch folded into wxt/be at pack time; the periodic input t is just
    # lane column D of the same matmul result.
    r0 = mx(x.astype(bf16), wxt)                                 # (N, D+1) f32
    hx = r0[:, :D]
    t = r0[:, D:D + 1]
    h = hx + jnp.sin(t + bt) * wes + be                          # (N, D) f32

    # ---- single-head attention over the merged batch (block-diagonal mask) -------------
    # scores = (h Wq)(h Wk)^T / sqrt(A) == (h Wm) h^T ;  attn = p (h Wv) Wh == p (h Wvh).
    # Wm and Wvh are packed side-by-side -> one MXU trip, two lane slices.
    h_bf = h.astype(bf16)                                        # cast once, reuse
    r1 = mx(h_bf, wmv)                                           # (N, 2D) f32
    hm = r1[:, :D]
    vh = r1[:, D:2 * D]
    # NOTE(v5e): dot_general with contraction on dim 1 of both operands lowers to a
    # transposed-RHS matmul (no materialized transpose of h); verified via lower_as_mlir.
    scores = mx(hm.astype(bf16), h_bf, (((1,), (1,)), ((), ()))) + amask   # (N, N)
    m = jnp.max(scores, axis=-1, keepdims=True)
    p = jnp.exp(scores - m)
    p = p * pl.reciprocal(jnp.sum(p, axis=-1, keepdims=True), approx=True)
    a = mx(p.astype(bf16), vh.astype(bf16))                      # (N, D)

    def layer_norm(z, g, bb):
        mu = jnp.mean(z, axis=-1, keepdims=True)
        var = jnp.mean(jnp.square(z - mu), axis=-1, keepdims=True)
        return (z - mu) * jax.lax.rsqrt(var + 1e-5) * g + bb

    h = layer_norm(h + a, g1, bb1)                               # norm1(x + attn)

    # ---- feed-forward: fc1(relu(fc2(x))) ------------------------------------------------
    h_bf = h.astype(bf16)
    ff = jnp.maximum(mx(h_bf, wfc2) + bfc2, 0.0)                 # (N, D) f32
    a = mx(ff.astype(bf16), wfc1) + bfc1                         # (N, D) f32
    h = layer_norm(h + a, g2, bb2)                               # norm2(x + ffn)

    # ---- final relu + out_fc over the flattened (S*D) features, one scalar / sequence --
    e = jnp.maximum(h, 0.0)                                      # (N, D) f32
    lane_sum = jnp.sum(e * wout, axis=-1, keepdims=True)         # (N, 1) per-row partials
    grouped = lane_sum * sel                                     # (N, B) one-hot scatter
    o_ref[...] = jnp.sum(grouped, axis=0, keepdims=True) + bout  # (1, B) lane-dense row


# ----------------------------------- wrapper (glue) -------------------------------------
def transformer_forward(x, slab):
    b, s, f = x.shape
    out = pl.pallas_call(
        _transformer_kernel,
        out_shape=jax.ShapeDtypeStruct((1, b), jnp.float32),
        grid=(1,),
        in_specs=[pl.BlockSpec((b * s, f), lambda i: (0, 0)),
                  pl.BlockSpec((SLAB_ROWS, SLAB_COLS), lambda i: (0, 0))],
        out_specs=pl.BlockSpec((1, b), lambda i: (0, 0)),
        compiler_params=pltpu.CompilerParams(dimension_semantics=("arbitrary",)),
    )(x.reshape(b * s, f), slab)
    return out.reshape(b, 1)                                     # (B, 1), as the module


# ------------------------------ deterministic parameter init ----------------------------
def init_params(key):
    ks = jax.random.split(key, 16)

    def w(k, shape, scale=0.1):
        return scale * jax.random.normal(k, shape, jnp.float32)

    wt, bt = w(ks[0], (F, K - 1)), w(ks[1], (1, K - 1))          # Time2Vec periodic
    w0, b0 = w(ks[2], (F, 1)), w(ks[3], (1, 1))                  # Time2Vec linear
    we, be = w(ks[4], (F + K, D)), w(ks[5], (1, D))              # enc_input_fc
    wq, wk = w(ks[6], (D, A)), w(ks[7], (D, A))                  # attention Q / K (no bias)
    wv, wh = w(ks[8], (D, D)), w(ks[9], (D, D))                  # attention V / head fc
    g1, bb1 = jnp.ones((1, D), jnp.float32), jnp.zeros((1, D), jnp.float32)
    wfc2, bfc2 = w(ks[10], (D, D)), w(ks[11], (1, D))
    wfc1, bfc1 = w(ks[12], (D, D)), w(ks[13], (1, D))
    g2, bb2 = jnp.ones((1, D), jnp.float32), jnp.zeros((1, D), jnp.float32)
    wout, bout = w(ks[14], (S, D)), w(ks[15], (1, 1))            # out_fc ((1,S*D) row-major)
    return (wt, bt, w0, b0, we, be, wq, wk, wv, wh,
            g1, bb1, wfc2, bfc2, wfc1, bfc1, g2, bb2, wout, bout)


# ----------------------------- host-side parameter packing ------------------------------
def build_slab(params):
    (wt, bt, w0, b0, we, be, wq, wk, wv, wh,
     g1, bb1, wfc2, bfc2, wfc1, bfc1, g2, bb2, wout, bout) = params
    assert K == 2, "packing assumes the module default time_embd=2"

    wex, wes, we0 = we[:F], we[F:F + 1], we[F + 1:F + 2]
    wex_f = wex + w0 @ we0                  # fold the linear Time2Vec branch into enc fc
    be_f = be + b0 * we0                    # ... and its bias
    wm = (wq / math.sqrt(A)) @ wk.T         # (h Wm) h^T == (h Wq)(h Wk)^T / sqrt(A)
    wvh = wv @ wh                           # fold value proj + head combine (n_heads = 1)

    bid = jnp.arange(N) // S                # sequences never attend across the batch
    amask = jnp.where(bid[:, None] == bid[None, :], 0.0, -1e9).astype(jnp.float32)
    sel = (bid[:, None] == jnp.arange(B)[None, :]).astype(jnp.float32)      # (N, B)
    wout_tiled = jnp.tile(wout, (B, 1))                                     # (N, D)

    slab = jnp.zeros((SLAB_ROWS, SLAB_COLS), jnp.float32)
    slab = slab.at[ROW_WXT:ROW_WXT + F, :D].set(wex_f)
    slab = slab.at[ROW_WXT:ROW_WXT + F, D:D + 1].set(wt)
    slab = slab.at[ROW_VEC + VR_BT, :1].set(bt[0])
    slab = slab.at[ROW_VEC + VR_WES, :D].set(wes[0])
    slab = slab.at[ROW_VEC + VR_BE, :D].set(be_f[0])
    slab = slab.at[ROW_VEC + VR_G1, :D].set(g1[0])
    slab = slab.at[ROW_VEC + VR_B1, :D].set(bb1[0])
    slab = slab.at[ROW_VEC + VR_BFC2, :D].set(bfc2[0])
    slab = slab.at[ROW_VEC + VR_BFC1, :D].set(bfc1[0])
    slab = slab.at[ROW_VEC + VR_G2, :D].set(g2[0])
    slab = slab.at[ROW_VEC + VR_B2, :D].set(bb2[0])
    slab = slab.at[ROW_VEC + VR_BOUT, :1].set(bout[0])
    slab = slab.at[ROW_WMV:ROW_WMV + D, :D].set(wm)
    slab = slab.at[ROW_WMV:ROW_WMV + D, D:2 * D].set(wvh)
    slab = slab.at[ROW_WFC2:ROW_WFC2 + D, :D].set(wfc2)
    slab = slab.at[ROW_WFC1:ROW_WFC1 + D, :D].set(wfc1)
    slab = slab.at[ROW_WOUT:ROW_WOUT + N, :D].set(wout_tiled)
    slab = slab.at[ROW_SEL:ROW_SEL + N, :B].set(sel)
    slab = slab.at[ROW_MASK:ROW_MASK + N, :N].set(amask)
    # bf16 storage: halves the parameter DMA and removes per-call weight casts; bias / LN /
    # mask / selector values promote back to f32 when combined with f32 activations.
    return slab.astype(jnp.bfloat16)


# ------------------------------- pure-JAX reference (check) -----------------------------
def reference_forward(x, params):
    """Mirrors the PyTorch module; matmul inputs cast to bf16 (f32 accumulation) to match
    the kernel's native-MXU precision."""
    (wt, bt, w0, b0, we, be, wq, wk, wv, wh,
     g1, bb1, wfc2, bfc2, wfc1, bfc1, g2, bb2, wout, bout) = params
    f32 = jnp.float32
    bf = lambda t: t.astype(jnp.bfloat16)

    def bdot(u, w):
        return jnp.dot(bf(u), bf(w), preferred_element_type=f32)

    def edot(u, w):
        return jnp.einsum("bsd,de->bse", bf(u), bf(w), preferred_element_type=f32)

    b, s, f = x.shape
    xf = x.reshape(b * s, f)
    t2v = jnp.concatenate([jnp.sin(bdot(xf, wt) + bt), bdot(xf, w0) + b0], axis=-1)
    cat = jnp.concatenate([xf, t2v], axis=-1)                    # (B*S, F+K)
    h = (bdot(cat, we) + be).reshape(b, s, D)                    # enc_input_fc

    q, k, v = edot(h, wq), edot(h, wk), edot(h, wv)
    sc = jnp.einsum("bsa,bta->bst", bf(q), bf(k),
                    preferred_element_type=f32) / math.sqrt(A)
    p = jax.nn.softmax(sc, axis=-1)
    attn = jnp.einsum("bst,btd->bsd", bf(p), bf(v), preferred_element_type=f32)
    a = edot(attn, wh)

    def ln(z, g, bb):
        mu = z.mean(-1, keepdims=True)
        var = ((z - mu) ** 2).mean(-1, keepdims=True)
        return (z - mu) * jax.lax.rsqrt(var + 1e-5) * g + bb

    h = ln(h + a, g1, bb1)
    a = edot(jnp.maximum(edot(h, wfc2) + bfc2, 0.0), wfc1) + bfc1
    h = ln(h + a, g2, bb2)
    e = jnp.maximum(h, 0.0).reshape(b, -1)                       # flatten(start_dim=1)
    return bdot(e, wout.reshape(-1, 1)) + bout


# --------------------------------------- main -------------------------------------------
if __name__ == "__main__":
    key = jax.random.PRNGKey(0)
    kx, kp = jax.random.split(key)
    x = jax.random.normal(kx, (B, S, F), jnp.float32)
    params = init_params(kp)
    slab = build_slab(params)

    out = transformer_forward(x, slab)
    out = jax.block_until_ready(out)
    assert out.shape == (B, 1) and out.dtype == jnp.float32

    ref = reference_forward(x, params)
    # bf16-stored weights/biases, folded Wm / Wvh operators (different bf16 contraction
    # widths than the reference) and the approx softmax reciprocal -> few e-2 slack.
    assert jnp.allclose(out, ref, atol=3e-2, rtol=3e-2), (out, ref)

    print("KERNEL_OK")
</pallas_src>

<mosaic_0001>
module attributes {stable_mosaic.version = 11 : i64} {
  func.func @_transformer_kernel(%arg0: i32, %arg1: memref<16x6xf32, #tpu.memory_space<vmem>>, %arg2: memref<168x128xbf16, #tpu.memory_space<vmem>>, %arg3: memref<1x2xf32, #tpu.memory_space<vmem>>) attributes {dimension_semantics = [#tpu.dimension_semantics<arbitrary>], iteration_bounds = array<i64: 1>, scalar_prefetch = 0 : i64, scratch_operands = 0 : i64, tpu.core_type = #tpu.core_type<tc>, window_params = [{pipeline_mode = #tpu.pipeline_mode<synchronous>, transform_indices = @transform_0, window_bounds = array<i64: 16, 6>}, {pipeline_mode = #tpu.pipeline_mode<synchronous>, transform_indices = @transform_1, window_bounds = array<i64: 168, 128>}, {pipeline_mode = #tpu.pipeline_mode<synchronous>, transform_indices = @transform_2, window_bounds = array<i64: 1, 2>}]} {
    %c0 = arith.constant 0 : index
    %c0_0 = arith.constant 0 : index
    %0 = vector.load %arg1[%c0, %c0_0] : memref<16x6xf32, #tpu.memory_space<vmem>>, vector<16x6xf32>
    %c0_1 = arith.constant 0 : index
    %c0_2 = arith.constant 0 : index
    %1 = vector.load %arg2[%c0_1, %c0_2] : memref<168x128xbf16, #tpu.memory_space<vmem>>, vector<6x33xbf16>
    %c24 = arith.constant 24 : index
    %c0_3 = arith.constant 0 : index
    %2 = vector.load %arg2[%c24, %c0_3] : memref<168x128xbf16, #tpu.memory_space<vmem>>, vector<32x64xbf16>
    %c56 = arith.constant 56 : index
    %c0_4 = arith.constant 0 : index
    %3 = vector.load %arg2[%c56, %c0_4] : memref<168x128xbf16, #tpu.memory_space<vmem>>, vector<32x32xbf16>
    %c88 = arith.constant 88 : index
    %c0_5 = arith.constant 0 : index
    %4 = vector.load %arg2[%c88, %c0_5] : memref<168x128xbf16, #tpu.memory_space<vmem>>, vector<32x32xbf16>
    %c120 = arith.constant 120 : index
    %c0_6 = arith.constant 0 : index
    %5 = vector.load %arg2[%c120, %c0_6] : memref<168x128xbf16, #tpu.memory_space<vmem>>, vector<16x32xbf16>
    %c136 = arith.constant 136 : index
    %c0_7 = arith.constant 0 : index
    %6 = vector.load %arg2[%c136, %c0_7] : memref<168x128xbf16, #tpu.memory_space<vmem>>, vector<16x2xbf16>
    %c152 = arith.constant 152 : index
    %c0_8 = arith.constant 0 : index
    %7 = vector.load %arg2[%c152, %c0_8] : memref<168x128xbf16, #tpu.memory_space<vmem>>, vector<16x16xbf16>
    %c8 = arith.constant 8 : index
    %c0_9 = arith.constant 0 : index
    %8 = vector.load %arg2[%c8, %c0_9] : memref<168x128xbf16, #tpu.memory_space<vmem>>, vector<1x1xbf16>
    %c9 = arith.constant 9 : index
    %c0_10 = arith.constant 0 : index
    %9 = vector.load %arg2[%c9, %c0_10] : memref<168x128xbf16, #tpu.memory_space<vmem>>, vector<1x32xbf16>
    %c10 = arith.constant 10 : index
    %c0_11 = arith.constant 0 : index
    %10 = vector.load %arg2[%c10, %c0_11] : memref<168x128xbf16, #tpu.memory_space<vmem>>, vector<1x32xbf16>
    %c11 = arith.constant 11 : index
    %c0_12 = arith.constant 0 : index
    %11 = vector.load %arg2[%c11, %c0_12] : memref<168x128xbf16, #tpu.memory_space<vmem>>, vector<1x32xbf16>
    %c12 = arith.constant 12 : index
    %c0_13 = arith.constant 0 : index
    %12 = vector.load %arg2[%c12, %c0_13] : memref<168x128xbf16, #tpu.memory_space<vmem>>, vector<1x32xbf16>
    %c13 = arith.constant 13 : index
    %c0_14 = arith.constant 0 : index
    %13 = vector.load %arg2[%c13, %c0_14] : memref<168x128xbf16, #tpu.memory_space<vmem>>, vector<1x32xbf16>
    %c14 = arith.constant 14 : index
    %c0_15 = arith.constant 0 : index
    %14 = vector.load %arg2[%c14, %c0_15] : memref<168x128xbf16, #tpu.memory_space<vmem>>, vector<1x32xbf16>
    %c15 = arith.constant 15 : index
    %c0_16 = arith.constant 0 : index
    %15 = vector.load %arg2[%c15, %c0_16] : memref<168x128xbf16, #tpu.memory_space<vmem>>, vector<1x32xbf16>
    %c16 = arith.constant 16 : index
    %c0_17 = arith.constant 0 : index
    %16 = vector.load %arg2[%c16, %c0_17] : memref<168x128xbf16, #tpu.memory_space<vmem>>, vector<1x32xbf16>
    %c17 = arith.constant 17 : index
    %c0_18 = arith.constant 0 : index
    %17 = vector.load %arg2[%c17, %c0_18] : memref<168x128xbf16, #tpu.memory_space<vmem>>, vector<1x1xbf16>
    %18 = arith.truncf %0 : vector<16x6xf32> to vector<16x6xbf16>
    %cst = arith.constant dense<0.000000e+00> : vector<16x33xf32>
    %19 = tpu.matmul %18, %1, %cst {dimension_numbers = #tpu.dot_dimension_numbers<[1], [0], [0], [1], [0, 0, 1, 1], [], []>} : vector<16x6xbf16>, vector<6x33xbf16>, vector<16x33xf32> -> vector<16x33xf32>
    %20 = vector.extract_strided_slice %19 {offsets = [0, 0], sizes = [16, 32], strides = [1, 1]} : vector<16x33xf32> to vector<16x32xf32>
    %21 = vector.extract_strided_slice %19 {offsets = [0, 32], sizes = [16, 1], strides = [1, 1]} : vector<16x33xf32> to vector<16x1xf32>
    %22 = arith.extf %8 : vector<1x1xbf16> to vector<1x1xf32>
    %23 = vector.broadcast %22 : vector<1x1xf32> to vector<16x1xf32>
    %24 = arith.addf %21, %23 : vector<16x1xf32>
    %25 = math.sin %24 : vector<16x1xf32>
    %26 = arith.extf %9 : vector<1x32xbf16> to vector<1x32xf32>
    %27 = vector.broadcast %25 : vector<16x1xf32> to vector<16x32xf32>
    %28 = vector.broadcast %26 : vector<1x32xf32> to vector<16x32xf32>
    %29 = arith.mulf %27, %28 : vector<16x32xf32>
    %30 = arith.addf %20, %29 : vector<16x32xf32>
    %31 = arith.extf %10 : vector<1x32xbf16> to vector<1x32xf32>
    %32 = vector.broadcast %31 : vector<1x32xf32> to vector<16x32xf32>
    %33 = arith.addf %30, %32 : vector<16x32xf32>
    %34 = arith.truncf %33 : vector<16x32xf32> to vector<16x32xbf16>
    %cst_19 = arith.constant dense<0.000000e+00> : vector<16x64xf32>
    %35 = tpu.matmul %34, %2, %cst_19 {dimension_numbers = #tpu.dot_dimension_numbers<[1], [0], [0], [1], [0, 0, 1, 1], [], []>} : vector<16x32xbf16>, vector<32x64xbf16>, vector<16x64xf32> -> vector<16x64xf32>
    %36 = vector.extract_strided_slice %35 {offsets = [0, 0], sizes = [16, 32], strides = [1, 1]} : vector<16x64xf32> to vector<16x32xf32>
    %37 = vector.extract_strided_slice %35 {offsets = [0, 32], sizes = [16, 32], strides = [1, 1]} : vector<16x64xf32> to vector<16x32xf32>
    %38 = arith.truncf %36 : vector<16x32xf32> to vector<16x32xbf16>
    %cst_20 = arith.constant dense<0.000000e+00> : vector<16x16xf32>
    %39 = tpu.matmul %38, %34, %cst_20 {dimension_numbers = #tpu.dot_dimension_numbers<[1], [1], [0], [0], [0, 0, 1, 0], [], []>} : vector<16x32xbf16>, vector<16x32xbf16>, vector<16x16xf32> -> vector<16x16xf32>
    %40 = arith.extf %7 : vector<16x16xbf16> to vector<16x16xf32>
    %41 = arith.addf %39, %40 : vector<16x16xf32>
    %cst_21 = arith.constant dense<0xFF800000> : vector<16xf32>
    %42 = vector.multi_reduction <maximumf>, %41, %cst_21 [1] : vector<16x16xf32> to vector<16xf32>
    %43 = vector.shape_cast %42 : vector<16xf32> to vector<16x1xf32>
    %44 = vector.broadcast %43 : vector<16x1xf32> to vector<16x16xf32>
    %45 = arith.subf %41, %44 : vector<16x16xf32>
    %46 = math.exp %45 : vector<16x16xf32>
    %cst_22 = arith.constant dense<0.000000e+00> : vector<16xf32>
    %47 = vector.multi_reduction <add>, %46, %cst_22 [1] : vector<16x16xf32> to vector<16xf32>
    %48 = vector.shape_cast %47 : vector<16xf32> to vector<16x1xf32>
    %49 = tpu.reciprocal %48 {approx = true} : vector<16x1xf32> -> vector<16x1xf32>
    %50 = vector.broadcast %49 : vector<16x1xf32> to vector<16x16xf32>
    %51 = arith.mulf %46, %50 : vector<16x16xf32>
    %52 = arith.truncf %51 : vector<16x16xf32> to vector<16x16xbf16>
    %53 = arith.truncf %37 : vector<16x32xf32> to vector<16x32xbf16>
    %cst_23 = arith.constant dense<0.000000e+00> : vector<16x32xf32>
    %54 = tpu.matmul %52, %53, %cst_23 {dimension_numbers = #tpu.dot_dimension_numbers<[1], [0], [0], [1], [0, 0, 1, 1], [], []>} : vector<16x16xbf16>, vector<16x32xbf16>, vector<16x32xf32> -> vector<16x32xf32>
    %55 = arith.addf %33, %54 : vector<16x32xf32>
    %cst_24 = arith.constant dense<0.000000e+00> : vector<16xf32>
    %56 = vector.multi_reduction <add>, %55, %cst_24 [1] : vector<16x32xf32> to vector<16xf32>
    %57 = vector.shape_cast %56 : vector<16xf32> to vector<16x1xf32>
    %cst_25 = arith.constant 3.200000e+01 : f32
    %58 = vector.broadcast %cst_25 : f32 to vector<16x1xf32>
    %59 = arith.divf %57, %58 : vector<16x1xf32>
    %60 = vector.broadcast %59 : vector<16x1xf32> to vector<16x32xf32>
    %61 = arith.subf %55, %60 : vector<16x32xf32>
    %62 = arith.mulf %61, %61 : vector<16x32xf32>
    %cst_26 = arith.constant dense<0.000000e+00> : vector<16xf32>
    %63 = vector.multi_reduction <add>, %62, %cst_26 [1] : vector<16x32xf32> to vector<16xf32>
    %64 = vector.shape_cast %63 : vector<16xf32> to vector<16x1xf32>
    %cst_27 = arith.constant 3.200000e+01 : f32
    %65 = vector.broadcast %cst_27 : f32 to vector<16x1xf32>
    %66 = arith.divf %64, %65 : vector<16x1xf32>
    %67 = vector.broadcast %59 : vector<16x1xf32> to vector<16x32xf32>
    %68 = arith.subf %55, %67 : vector<16x32xf32>
    %cst_28 = arith.constant 9.99999974E-6 : f32
    %69 = vector.broadcast %cst_28 : f32 to vector<16x1xf32>
    %70 = arith.addf %66, %69 : vector<16x1xf32>
    %71 = math.rsqrt %70 : vector<16x1xf32>
    %72 = vector.broadcast %71 : vector<16x1xf32> to vector<16x32xf32>
    %73 = arith.mulf %68, %72 : vector<16x32xf32>
    %74 = arith.extf %11 : vector<1x32xbf16> to vector<1x32xf32>
    %75 = vector.broadcast %74 : vector<1x32xf32> to vector<16x32xf32>
    %76 = arith.mulf %73, %75 : vector<16x32xf32>
    %77 = arith.extf %12 : vector<1x32xbf16> to vector<1x32xf32>
    %78 = vector.broadcast %77 : vector<1x32xf32> to vector<16x32xf32>
    %79 = arith.addf %76, %78 : vector<16x32xf32>
    %80 = arith.truncf %79 : vector<16x32xf32> to vector<16x32xbf16>
    %cst_29 = arith.constant dense<0.000000e+00> : vector<16x32xf32>
    %81 = tpu.matmul %80, %3, %cst_29 {dimension_numbers = #tpu.dot_dimension_numbers<[1], [0], [0], [1], [0, 0, 1, 1], [], []>} : vector<16x32xbf16>, vector<32x32xbf16>, vector<16x32xf32> -> vector<16x32xf32>
    %82 = arith.extf %13 : vector<1x32xbf16> to vector<1x32xf32>
    %83 = vector.broadcast %82 : vector<1x32xf32> to vector<16x32xf32>
    %84 = arith.addf %81, %83 : vector<16x32xf32>
    %cst_30 = arith.constant 0.000000e+00 : f32
    %85 = vector.broadcast %cst_30 : f32 to vector<16x32xf32>
    %86 = arith.maximumf %84, %85 : vector<16x32xf32>
    %87 = arith.truncf %86 : vector<16x32xf32> to vector<16x32xbf16>
    %cst_31 = arith.constant dense<0.000000e+00> : vector<16x32xf32>
    %88 = tpu.matmul %87, %4, %cst_31 {dimension_numbers = #tpu.dot_dimension_numbers<[1], [0], [0], [1], [0, 0, 1, 1], [], []>} : vector<16x32xbf16>, vector<32x32xbf16>, vector<16x32xf32> -> vector<16x32xf32>
    %89 = arith.extf %14 : vector<1x32xbf16> to vector<1x32xf32>
    %90 = vector.broadcast %89 : vector<1x32xf32> to vector<16x32xf32>
    %91 = arith.addf %88, %90 : vector<16x32xf32>
    %92 = arith.addf %79, %91 : vector<16x32xf32>
    %cst_32 = arith.constant dense<0.000000e+00> : vector<16xf32>
    %93 = vector.multi_reduction <add>, %92, %cst_32 [1] : vector<16x32xf32> to vector<16xf32>
    %94 = vector.shape_cast %93 : vector<16xf32> to vector<16x1xf32>
    %cst_33 = arith.constant 3.200000e+01 : f32
    %95 = vector.broadcast %cst_33 : f32 to vector<16x1xf32>
    %96 = arith.divf %94, %95 : vector<16x1xf32>
    %97 = vector.broadcast %96 : vector<16x1xf32> to vector<16x32xf32>
    %98 = arith.subf %92, %97 : vector<16x32xf32>
    %99 = arith.mulf %98, %98 : vector<16x32xf32>
    %cst_34 = arith.constant dense<0.000000e+00> : vector<16xf32>
    %100 = vector.multi_reduction <add>, %99, %cst_34 [1] : vector<16x32xf32> to vector<16xf32>
    %101 = vector.shape_cast %100 : vector<16xf32> to vector<16x1xf32>
    %cst_35 = arith.constant 3.200000e+01 : f32
    %102 = vector.broadcast %cst_35 : f32 to vector<16x1xf32>
    %103 = arith.divf %101, %102 : vector<16x1xf32>
    %104 = vector.broadcast %96 : vector<16x1xf32> to vector<16x32xf32>
    %105 = arith.subf %92, %104 : vector<16x32xf32>
    %cst_36 = arith.constant 9.99999974E-6 : f32
    %106 = vector.broadcast %cst_36 : f32 to vector<16x1xf32>
    %107 = arith.addf %103, %106 : vector<16x1xf32>
    %108 = math.rsqrt %107 : vector<16x1xf32>
    %109 = vector.broadcast %108 : vector<16x1xf32> to vector<16x32xf32>
    %110 = arith.mulf %105, %109 : vector<16x32xf32>
    %111 = arith.extf %15 : vector<1x32xbf16> to vector<1x32xf32>
    %112 = vector.broadcast %111 : vector<1x32xf32> to vector<16x32xf32>
    %113 = arith.mulf %110, %112 : vector<16x32xf32>
    %114 = arith.extf %16 : vector<1x32xbf16> to vector<1x32xf32>
    %115 = vector.broadcast %114 : vector<1x32xf32> to vector<16x32xf32>
    %116 = arith.addf %113, %115 : vector<16x32xf32>
    %cst_37 = arith.constant 0.000000e+00 : f32
    %117 = vector.broadcast %cst_37 : f32 to vector<16x32xf32>
    %118 = arith.maximumf %116, %117 : vector<16x32xf32>
    %119 = arith.extf %5 : vector<16x32xbf16> to vector<16x32xf32>
    %120 = arith.mulf %118, %119 : vector<16x32xf32>
    %cst_38 = arith.constant dense<0.000000e+00> : vector<16xf32>
    %121 = vector.multi_reduction <add>, %120, %cst_38 [1] : vector<16x32xf32> to vector<16xf32>
    %122 = vector.shape_cast %121 : vector<16xf32> to vector<16x1xf32>
    %123 = arith.extf %6 : vector<16x2xbf16> to vector<16x2xf32>
    %124 = vector.broadcast %122 : vector<16x1xf32> to vector<16x2xf32>
    %125 = arith.mulf %124, %123 : vector<16x2xf32>
    %cst_39 = arith.constant dense<0.000000e+00> : vector<2xf32>
    %126 = vector.multi_reduction <add>, %125, %cst_39 [0] : vector<16x2xf32> to vector<2xf32>
    %127 = vector.shape_cast %126 : vector<2xf32> to vector<1x2xf32>
    %128 = arith.extf %17 : vector<1x1xbf16> to vector<1x1xf32>
    %129 = vector.broadcast %128 : vector<1x1xf32> to vector<1x2xf32>
    %130 = arith.addf %127, %129 : vector<1x2xf32>
    %c0_40 = arith.constant 0 : index
    %c0_41 = arith.constant 0 : index
    %131 = vector.load %arg3[%c0_40, %c0_41] : memref<1x2xf32, #tpu.memory_space<vmem>>, vector<1x2xf32>
    tpu.vector_store %arg3[%c0_40, %c0_41], %130 {strides = array<i32>} : memref<1x2xf32, #tpu.memory_space<vmem>>, vector<1x2xf32>,
    return
  }
  func.func @transform_0(%arg0: i32) -> (i32, i32) {
    %c0_i32 = arith.constant 0 : i32
    %c0_i32_0 = arith.constant 0 : i32
    %c0_i32_1 = arith.constant 0 : i32
    return %c0_i32, %c0_i32_0 : i32, i32
  }
  func.func @transform_1(%arg0: i32) -> (i32, i32) {
    %c0_i32 = arith.constant 0 : i32
    %c0_i32_0 = arith.constant 0 : i32
    %c0_i32_1 = arith.constant 0 : i32
    return %c0_i32, %c0_i32_0 : i32, i32
  }
  func.func @transform_2(%arg0: i32) -> (i32, i32) {
    %c0_i32 = arith.constant 0 : i32
    %c0_i32_0 = arith.constant 0 : i32
    %c0_i32_1 = arith.constant 0 : i32
    return %c0_i32, %c0_i32_0 : i32, i32
  }
}

</mosaic_0001>

<llo_original>
// kernel: tpu_custom_call.1
$region0: #{tpu_custom_call.1}
  #allocation0 [shape = 'u32[]', space=smem, size = 0x4, offset = 0x4, fixed_abs, tag = 'smem constant byte address 0x4 - core index']
  #allocation1 [shape = 'u32[144,128]{1,0:T(1,128)}', space=vmem, size = 0x12000, scoped, tag = 'internal scratch']
  %s0 = inlined_call_operand.vmem [shape: f32[16,6], index: 0, kind: input, shape index: {}]
  %s1 = inlined_call_operand.hbm [shape: bf16[168,128], index: 1, kind: input, shape index: {}]
  %s2 = inlined_call_operand.hbm [shape: f32[1,2], index: 2, kind: output, shape index: {}]
  %s3 = sld [smem:[#allocation0]]
  $region22: #{tpu_custom_call.1} parent=0
    _
  %s5 = ssub.s32 1, %s3
  %s6 = scalar_select 0, %s5, %s3
  $region1: #{tpu_custom_call.1} parent=0
    #allocation2 [shape = 'u8[43008]{0}', space=vmem, size = 0xa800, scoped, tag = 'input window, operand 1, single buffered']
    #allocation3 [shape = 's32[1]{0}', space=sflag, size = 0x4, scoped, tag = 'scoped memory for tpu_custom_call.1']
    #allocation4 [shape = 's32[1]{0}', space=sflag, size = 0x4, scoped, tag = 'scoped memory for tpu_custom_call.1']
    #allocation5 [shape = 'u8[512]{0}', space=vmem, size = 0x400, scoped, tag = 'output window, operand 0, single buffered']
    %7 = vsyncpa [#allocation3], 0
    %8 = vsyncpa [#allocation4], 0
    // Predicated region
    $region2: #{tpu_custom_call.1} parent=1 // pred_check
      _
    $region3: #{tpu_custom_call.1} parent=1 // pred_check_branch
      %10 = sbr.rel (0) target = $region5
    $region4: #{tpu_custom_call.1} parent=1 // pred_region
      _
    $region5: #{tpu_custom_call.1} parent=1 // pred_fallthru
      _
    // Predicated region
    $region6: #{tpu_custom_call.1} parent=1 // pred_check
      _
    $region7: #{tpu_custom_call.1} parent=1 // pred_check_branch
      %12 = sbr.rel (0) target = $region9
    $region8: #{tpu_custom_call.1} parent=1 // pred_region
      %s14 = ssub.s32 1344, 1344
      %15 = vsyncadd [#allocation3], %s14
      %s16 = sshll.u32 [#allocation2], 4
      %s17 = int_to_ptr.vmem [resolvable:$true] %s16
      %22 = dma.hbm_to_vmem [thread:$0]  %s1, 1344, %s17, [#allocation3], 64, 64, 4
    $region9: #{tpu_custom_call.1} parent=1 // pred_fallthru
      _
    // Predicated region
    $region10: #{tpu_custom_call.1} parent=1 // pred_check
      _
    $region11: #{tpu_custom_call.1} parent=1 // pred_check_branch
      %24 = sbr.rel (0) target = $region13
    $region12: #{tpu_custom_call.1} parent=1 // pred_region
      %25 = dma.done [#allocation3], 1344
    $region13: #{tpu_custom_call.1} parent=1 // pred_fallthru
      _
    %v27 = vld [vmem:[%s0] sm:$0xff]
    %v28 = vld [vmem:[%s0 + $0x8] sm:$0xff]
    %v29 = vld [vmem:[#allocation2] sm:$0x7]
    %v30 = vld [vmem:[#allocation2 + $0xc] sm:$0xf]
    %v31 = vld [vmem:[#allocation2 + $0x10] sm:$0xf]
    %v32 = vld [vmem:[#allocation2 + $0x14] sm:$0xf]
    %v33 = vld [vmem:[#allocation2 + $0x18] sm:$0xf]
    %v34 = vld [vmem:[#allocation2 + $0x1c] sm:$0xf]
    %v35 = vld [vmem:[#allocation2 + $0x20] sm:$0xf]
    %v36 = vld [vmem:[#allocation2 + $0x24] sm:$0xf]
    %v37 = vld [vmem:[#allocation2 + $0x28] sm:$0xf]
    %v38 = vld [vmem:[#allocation2 + $0x2c] sm:$0xf]
    %v39 = vld [vmem:[#allocation2 + $0x30] sm:$0xf]
    %v40 = vld [vmem:[#allocation2 + $0x34] sm:$0xf]
    %v41 = vld [vmem:[#allocation2 + $0x38] sm:$0xf]
    %v42 = vld [vmem:[#allocation2 + $0x3c] sm:$0xf]
    %v43 = vld [vmem:[#allocation2 + $0x40] sm:$0xf]
    %v44 = vld [vmem:[#allocation2 + $0x44] sm:$0xf]
    %v45 = vld [vmem:[#allocation2 + $0x48] sm:$0xf]
    %v46 = vld [vmem:[#allocation2 + $0x4c] sm:$0xf]
    %v47 = vld [vmem:[#allocation2 + $0x50] sm:$0xf]
    %v48 = vld [vmem:[#allocation2 + $0x4] sm:$0x1]
    %v49 = vld [vmem:[#allocation2 + $0x4] sm:$0x2]
    %v50 = vld [vmem:[#allocation2 + $0x4] sm:$0x4]
    %v51 = vld [vmem:[#allocation2 + $0x4] sm:$0x8]
    %v52 = vld [vmem:[#allocation2 + $0x8] sm:$0x1]
    %v53 = vpack.c.bf16 %v28, %v27
    %vm54 = vcmask 48128
    %v56 = vsel %vm54, %v53, 0
    %vm58 = vcmask 1042432
    %v60 = vsel %vm58, %v29, 0
    %62 = vmatprep.subr.bf16.mxu0 0
    %63 = vmatpush1.bf16.msra.mxu0 0
    %64 = vmatprep.subr.bf16.mxu0 0
    %65 = vmatpush1.bf16.msra.mxu0 0
    %66 = vmatprep.subr.bf16.mxu0 0
    %67 = vmatpush1.bf16.msra.mxu0 0
    %68 = vmatprep.subr.bf16.mxu0 0
    %69 = vmatpush1.bf16.msra.mxu0 0
    %70 = vmatprep.subr.bf16.mxu0 0
    %71 = vmatpush1.bf16.msra.mxu0 0
    %72 = vmatprep.subr.bf16.mxu0 0
    %73 = vmatpush1.bf16.msra.mxu0 0
    %74 = vmatprep.subr.bf16.mxu0 0
    %75 = vmatpush1.bf16.msra.mxu0 0
    %76 = vmatprep.subr.bf16.mxu0 0
    %77 = vmatpush1.bf16.msra.mxu0 %v60
    %78 = vmatprep.subr.bf16.mxu0 0
    %79 = vmatpush2.bf16.msra.mxu0 0
    %80 = vmatprep.subr.bf16.mxu0 0
    %81 = vmatpush2.bf16.msra.mxu0 0
    %82 = vmatprep.subr.bf16.mxu0 0
    %83 = vmatpush2.bf16.msra.mxu0 0
    %84 = vmatprep.subr.bf16.mxu0 0
    %85 = vmatpush2.bf16.msra.mxu0 0
    %86 = vmatprep.subr.bf16.mxu0 0
    %87 = vmatpush2.bf16.msra.mxu0 0
    %88 = vmatprep.subr.bf16.mxu0 0
    %89 = vmatpush2.bf16.msra.mxu0 0
    %90 = vmatprep.subr.bf16.mxu0 0
    %91 = vmatpush2.bf16.msra.mxu0 0
    %92 = vmatprep.subr.bf16.mxu0 0
    %93 = vmatpush2.bf16.msra.mxu0 0
    %94 = vmatprep.mubr.bf16.mxu0 0
    %95 = vmatmul.mubr.bf16.gmra.mxu0 %v56
    %v96 = vpop.f32.mrf.mxu0
    %v97 = vadd.f32 0.0, %v96
    %v98 = vpop.f32.mrf.mxu0
    %v99 = vpop.f32.mrf.mxu0
    %v100 = vadd.f32 0.0, %v99
    %v101 = vpop.f32.mrf.mxu0
    %102 = vdwg.mxu0
    %v103 = vunpack.c.l.bf16 %v48
    %v104 = vlaneseq
    %v105 = vshrl.u32 %v104, 7
    %v106 = vsub.s32 0, %v105
    %v107 = vrot.slane %v103, %v106
    %109 = vrot.lane.b32.xlu0 %v107, 32
    %v110 = vpop.permute.xlu0 %109
    %v112 = vadd.f32 %v97, %v110
    %v113 = vadd.f32 %v100, %v110
    %v114 = vand.u32 2147483647, %v112
    %vm115 = vcmp.le.f32.partialorder %v114, 0.7853982
    %vm116 = vcmp.lt.s32.totalorder %v112, 0
    %v117 = vand.u32 %v112, 2139095040
    %v118 = vshrl.u32 %v117, 23
    %v119 = vsub.s32 %v118, 127
    %v120 = vand.u32 2147483647, %v112
    %v121 = vand.u32 %v120, 8388607
    %v122 = vor.u32 %v121, 8388608
    %v123 = vsub.s32 0, %v122
    %v124 = vadd.s32 %v119, 1
    %vm125 = vcmp.gt.s32.totalorder %v124, 0
    %v126 = vsel %vm125, %v124, 0
    %v127 = vshrl.u32 %v126, 5
    %v128 = vand.u32 %v126, 31
    %v129 = vsub.s32 32, %v128
    %v130 = vshrl.u32 683565275, %v129
    %v131 = vshll.u32 683565275, %v128
    %v132 = vshrl.u32 2475754826, %v129
    %v133 = vor.u32 %v131, %v132
    %v134 = vshll.u32 2475754826, %v128
    %v135 = vshrl.u32 2131351028, %v129
    %v136 = vor.u32 %v134, %v135
    %v137 = vshll.u32 2131351028, %v128
    %v138 = vshrl.u32 2102212464, %v129
    %v139 = vor.u32 %v137, %v138
    %v140 = vshll.u32 2102212464, %v128
    %v141 = vshrl.u32 920167782, %v129
    %v142 = vor.u32 %v140, %v141
    %v143 = vshll.u32 920167782, %v128
    %v144 = vshrl.u32 1326507024, %v129
    %v145 = vor.u32 %v143, %v144
    %vm146 = vcmp.lt.s32.totalorder %v127, 1
    %vm147 = vcmp.lt.s32.totalorder %v127, 2
    %vm148 = vcmp.lt.s32.totalorder %v127, 3
    %vm149 = vcmp.lt.s32.totalorder %v127, 4
    %v150 = vsel %vm146, %v130, %v133
    %v151 = vsel %vm149, %v139, 2102212464
    %v152 = vsel %vm148, %v136, %v151
    %v153 = vsel %vm147, %v150, %v152
    %v154 = vsel %vm146, %v133, %v136
    %v155 = vsel %vm149, %v142, 920167782
    %v156 = vsel %vm148, %v139, %v155
    %v157 = vsel %vm147, %v154, %v156
    %v158 = vsel %vm146, %v136, %v139
    %v159 = vsel %vm149, %v145, 1326507024
    %v160 = vsel %vm148, %v142, %v159
    %v161 = vsel %vm147, %v158, %v160
    %v162 = vshll.u32 %v122, 8
    %v163 = vmul.u32.u64.compose %v162, %v161
    %v164 = vextract.low.u32 %v163
    %v165 = vextract.high.u32 %v163
    %v166 = vmul.u32.u64.compose %v162, %v157
    %v167 = vextract.low.u32 %v166
    %v168 = vextract.high.u32 %v166
    %v169 = vmul.u32 %v162, %v153
    %v170 = vadd.s32 %v165, %v167
    %vm171 = vc.u32 %v165, %v167
    %v172 = vadd.s32 %v168, 1
    %v173 = vsel %vm171, %v172, %v168
    %v174 = vadd.s32 %v169, %v173
    %v175 = vadd.s32 %v174, 536870912
    %v176 = vshrl.u32 %v175, 30
    %v177 = vshll.u32 %v176, 30
    %v178 = vsub.s32 %v174, %v177
    %vm179 = vcmp.lt.s32.totalorder %v178, 0
    %v180 = vsub.s32 0, %v178
    %v181 = vsel %vm179, %v180, %v178
    %v182 = vclz %v181
    %v183 = vsub.s32 %v182, 2
    %vm184 = vcmp.gt.s32.totalorder 0, %v183
    %v185 = vsel %vm184, 0, %v183
    %v186 = vsub.s32 32, %v185
    %v187 = vshll.u32 %v178, %v185
    %v188 = vshrl.u32 %v170, %v186
    %v189 = vor.u32 %v187, %v188
    %v190 = vsub.s32 4294967266, %v185
    %v191 = vadd.s32 %v190, 127
    %v192 = vshll.u32 %v191, 23
    %v193 = vor.u32 4788187, %v192
    %v194 = vand.u32 2147483647, %v193
    %v196 = vcvt.s32.f32 %v189
    %v197 = vmul.f32 %v196, %v194
    %v198 = vxor.u32 %v197, 2147483648
    %v199 = vsel %vm116, %v198, %v197
    %v200 = vsub.s32 4, %v176
    %v201 = vsel %vm116, %v200, %v176
    %v202 = vsel %vm115, %v112, %v199
    %v203 = vsel %vm115, 0, %v201
    %v204 = vcosq.f32.pop %v202
    %v205 = vsinq.f32.pop %v202
    %vm206 = vweird.f32 %v112
    %v207 = vadd.s32 %v203, 3
    %v208 = vand.u32 %v207, 3
    %vm209 = vcmp.lt.s32.totalorder %v208, 2
    %vm210 = vcmp.eq.s32.totalorder %v208, 0
    %v211 = vxor.u32 %v205, 2147483648
    %v212 = vsel %vm210, %v204, %v211
    %vm213 = vcmp.eq.s32.totalorder %v208, 2
    %v214 = vxor.u32 %v204, 2147483648
    %v215 = vsel %vm213, %v214, %v205
    %v216 = vsel %vm209, %v212, %v215
    %v217 = vsel %vm206, nan, %v216
    %v218 = vand.u32 2147483647, %v113
    %vm219 = vcmp.le.f32.partialorder %v218, 0.7853982
    %vm220 = vcmp.lt.s32.totalorder %v113, 0
    %v221 = vand.u32 %v113, 2139095040
    %v222 = vshrl.u32 %v221, 23
    %v223 = vsub.s32 %v222, 127
    %v224 = vand.u32 2147483647, %v113
    %v225 = vand.u32 %v224, 8388607
    %v226 = vor.u32 %v225, 8388608
    %v227 = vsub.s32 0, %v226
    %v228 = vadd.s32 %v223, 1
    %vm229 = vcmp.gt.s32.totalorder %v228, 0
    %v230 = vsel %vm229, %v228, 0
    %v231 = vshrl.u32 %v230, 5
    %v232 = vand.u32 %v230, 31
    %v233 = vsub.s32 32, %v232
    %v234 = vshrl.u32 683565275, %v233
    %v235 = vshll.u32 683565275, %v232
    %v236 = vshrl.u32 2475754826, %v233
    %v237 = vor.u32 %v235, %v236
    %v238 = vshll.u32 2475754826, %v232
    %v239 = vshrl.u32 2131351028, %v233
    %v240 = vor.u32 %v238, %v239
    %v241 = vshll.u32 2131351028, %v232
    %v242 = vshrl.u32 2102212464, %v233
    %v243 = vor.u32 %v241, %v242
    %v244 = vshll.u32 2102212464, %v232
    %v245 = vshrl.u32 920167782, %v233
    %v246 = vor.u32 %v244, %v245
    %v247 = vshll.u32 920167782, %v232
    %v248 = vshrl.u32 1326507024, %v233
    %v249 = vor.u32 %v247, %v248
    %vm250 = vcmp.lt.s32.totalorder %v231, 1
    %vm251 = vcmp.lt.s32.totalorder %v231, 2
    %vm252 = vcmp.lt.s32.totalorder %v231, 3
    %vm253 = vcmp.lt.s32.totalorder %v231, 4
    %v254 = vsel %vm250, %v234, %v237
    %v255 = vsel %vm253, %v243, 2102212464
    %v256 = vsel %vm252, %v240, %v255
    %v257 = vsel %vm251, %v254, %v256
    %v258 = vsel %vm250, %v237, %v240
    %v259 = vsel %vm253, %v246, 920167782
    %v260 = vsel %vm252, %v243, %v259
    %v261 = vsel %vm251, %v258, %v260
    %v262 = vsel %vm250, %v240, %v243
    %v263 = vsel %vm253, %v249, 1326507024
    %v264 = vsel %vm252, %v246, %v263
    %v265 = vsel %vm251, %v262, %v264
    %v266 = vshll.u32 %v226, 8
    %v267 = vmul.u32.u64.compose %v266, %v265
    %v268 = vextract.low.u32 %v267
    %v269 = vextract.high.u32 %v267
    %v270 = vmul.u32.u64.compose %v266, %v261
    %v271 = vextract.low.u32 %v270
    %v272 = vextract.high.u32 %v270
    %v273 = vmul.u32 %v266, %v257
    %v274 = vadd.s32 %v269, %v271
    %vm275 = vc.u32 %v269, %v271
    %v276 = vadd.s32 %v272, 1
    %v277 = vsel %vm275, %v276, %v272
    %v278 = vadd.s32 %v273, %v277
    %v279 = vadd.s32 %v278, 536870912
    %v280 = vshrl.u32 %v279, 30
    %v281 = vshll.u32 %v280, 30
    %v282 = vsub.s32 %v278, %v281
    %vm283 = vcmp.lt.s32.totalorder %v282, 0
    %v284 = vsub.s32 0, %v282
    %v285 = vsel %vm283, %v284, %v282
    %v286 = vclz %v285
    %v287 = vsub.s32 %v286, 2
    %vm288 = vcmp.gt.s32.totalorder 0, %v287
    %v289 = vsel %vm288, 0, %v287
    %v290 = vsub.s32 32, %v289
    %v291 = vshll.u32 %v282, %v289
    %v292 = vshrl.u32 %v274, %v290
    %v293 = vor.u32 %v291, %v292
    %v294 = vsub.s32 4294967266, %v289
    %v295 = vadd.s32 %v294, 127
    %v296 = vshll.u32 %v295, 23
    %v297 = vor.u32 4788187, %v296
    %v298 = vand.u32 2147483647, %v297
    %v300 = vcvt.s32.f32 %v293
    %v301 = vmul.f32 %v300, %v298
    %v302 = vxor.u32 %v301, 2147483648
    %v303 = vsel %vm220, %v302, %v301
    %v304 = vsub.s32 4, %v280
    %v305 = vsel %vm220, %v304, %v280
    %v306 = vsel %vm219, %v113, %v303
    %v307 = vsel %vm219, 0, %v305
    %v308 = vcosq.f32.pop %v306
    %v309 = vsinq.f32.pop %v306
    %vm310 = vweird.f32 %v113
    %v311 = vadd.s32 %v307, 3
    %v312 = vand.u32 %v311, 3
    %vm313 = vcmp.lt.s32.totalorder %v312, 2
    %vm314 = vcmp.eq.s32.totalorder %v312, 0
    %v315 = vxor.u32 %v309, 2147483648
    %v316 = vsel %vm314, %v308, %v315
    %vm317 = vcmp.eq.s32.totalorder %v312, 2
    %v318 = vxor.u32 %v308, 2147483648
    %v319 = vsel %vm317, %v318, %v309
    %v320 = vsel %vm313, %v316, %v319
    %v321 = vsel %vm310, nan, %v320
    %323 = vset.pattern.permute.xlu0 32
    %324 = vperm.xlu0 %323, %v217
    %v325 = vpop.permute.xlu0 %324
    %328 = vset.pattern.permute.xlu0 32
    %329 = vperm.xlu0 %328, %v321
    %v330 = vpop.permute.xlu0 %329
    %v332 = vlaneseq
    %v333 = vshrl.u32 %v332, 7
    %v334 = vsub.s32 1, %v333
    %v335 = vrot.slane %v103, %v334
    %v336 = vmul.f32 %v325, %v335
    %v337 = vmul.f32 %v330, %v335
    %v338 = vadd.f32 %v97, %v336
    %v339 = vadd.f32 %v100, %v337
    %v340 = vunpack.c.l.bf16 %v49
    %v341 = vlaneseq
    %v342 = vshrl.u32 %v341, 7
    %v343 = vsub.s32 2, %v342
    %v344 = vrot.slane %v340, %v343
    %v345 = vadd.f32 %v338, %v344
    %v346 = vadd.f32 %v339, %v344
    %v347 = vpack.c.bf16 %v346, %v345
    %v352 = vunpack.c.l.b16 %v30
    %v353 = vunpack.c.l.b16 %v31
    %v354 = vunpack.c.l.b16 %v32
    %v355 = vunpack.c.l.b16 %v33
    %v356 = vpack.c.b16 %v353, %v352
    %v357 = vpack.c.b16 %v355, %v354
    %vm360 = vcmask 261120
    %v362 = vsel %vm360, %v347, 0
    %364 = vmatprep.subr.bf16.mxu0 0
    %365 = vmatpush1.bf16.msra.mxu0 0
    %366 = vmatprep.subr.bf16.mxu0 0
    %367 = vmatpush1.bf16.msra.mxu0 0
    %368 = vmatprep.subr.bf16.mxu0 0
    %369 = vmatpush1.bf16.msra.mxu0 0
    %370 = vmatprep.subr.bf16.mxu0 0
    %371 = vmatpush1.bf16.msra.mxu0 0
    %372 = vmatprep.subr.bf16.mxu0 0
    %373 = vmatpush1.bf16.msra.mxu0 0
    %374 = vmatprep.subr.bf16.mxu0 0
    %375 = vmatpush1.bf16.msra.mxu0 0
    %376 = vmatprep.subr.bf16.mxu0 0
    %377 = vmatpush1.bf16.msra.mxu0 %v357
    %378 = vmatprep.subr.bf16.mxu0 0
    %379 = vmatpush1.bf16.msra.mxu0 %v356
    %380 = vmatprep.subr.bf16.mxu0 0
    %381 = vmatpush2.bf16.msra.mxu0 0
    %382 = vmatprep.subr.bf16.mxu0 0
    %383 = vmatpush2.bf16.msra.mxu0 0
    %384 = vmatprep.subr.bf16.mxu0 0
    %385 = vmatpush2.bf16.msra.mxu0 0
    %386 = vmatprep.subr.bf16.mxu0 0
    %387 = vmatpush2.bf16.msra.mxu0 0
    %388 = vmatprep.subr.bf16.mxu0 0
    %389 = vmatpush2.bf16.msra.mxu0 0
    %390 = vmatprep.subr.bf16.mxu0 0
    %391 = vmatpush2.bf16.msra.mxu0 0
    %392 = vmatprep.subr.bf16.mxu0 0
    %393 = vmatpush2.bf16.msra.mxu0 0
    %394 = vmatprep.subr.bf16.mxu0 0
    %395 = vmatpush2.bf16.msra.mxu0 0
    %396 = vmatprep.mubr.bf16.mxu0 0
    %397 = vmatmul.mubr.bf16.gmra.mxu0 %v362
    %v398 = vpop.f32.mrf.mxu0
    %v399 = vadd.f32 0.0, %v398
    %v400 = vpop.f32.mrf.mxu0
    %v401 = vpop.f32.mrf.mxu0
    %v402 = vadd.f32 0.0, %v401
    %v403 = vpop.f32.mrf.mxu0
    %404 = vdwg.mxu0
    %v405 = vpack.c.bf16 %v402, %v399
    %v406 = vunpack.c.l.bf16 %v46
    %v407 = vunpack.c.l.bf16 %v47
    %v409 = vsel %vm360, %v405, 0
    %411 = vmatprep.subr.bf16.mxu0 0
    %412 = vmatpush1.bf16.xpose.msra.mxu0 0
    %413 = vmatprep.subr.bf16.mxu0 0
    %414 = vmatpush1.bf16.xpose.msra.mxu0 0
    %415 = vmatprep.subr.bf16.mxu0 0
    %416 = vmatpush1.bf16.xpose.msra.mxu0 0
    %417 = vmatprep.subr.bf16.mxu0 0
    %418 = vmatpush1.bf16.xpose.msra.mxu0 0
    %419 = vmatprep.subr.bf16.mxu0 0
    %420 = vmatpush1.bf16.xpose.msra.mxu0 0
    %421 = vmatprep.subr.bf16.mxu0 0
    %422 = vmatpush1.bf16.xpose.msra.mxu0 0
    %423 = vmatprep.subr.bf16.mxu0 0
    %424 = vmatpush1.bf16.xpose.msra.mxu0 0
    %425 = vmatprep.subr.bf16.mxu0 0
    %426 = vmatpush1.bf16.xpose.msra.mxu0 %v362
    %427 = vmatprep.subr.bf16.mxu0 0
    %428 = vmatpush2.bf16.xpose.msra.mxu0 0
    %429 = vmatprep.subr.bf16.mxu0 0
    %430 = vmatpush2.bf16.xpose.msra.mxu0 0
    %431 = vmatprep.subr.bf16.mxu0 0
    %432 = vmatpush2.bf16.xpose.msra.mxu0 0
    %433 = vmatprep.subr.bf16.mxu0 0
    %434 = vmatpush2.bf16.xpose.msra.mxu0 0
    %435 = vmatprep.subr.bf16.mxu0 0
    %436 = vmatpush2.bf16.xpose.msra.mxu0 0
    %437 = vmatprep.subr.bf16.mxu0 0
    %438 = vmatpush2.bf16.xpose.msra.mxu0 0
    %439 = vmatprep.subr.bf16.mxu0 0
    %440 = vmatpush2.bf16.xpose.msra.mxu0 0
    %441 = vmatprep.subr.bf16.mxu0 0
    %442 = vmatpush2.bf16.xpose.msra.mxu0 0
    %443 = vmatprep.mubr.bf16.mxu0 0
    %444 = vmatmul.mubr.bf16.gmra.mxu0 %v409
    %v445 = vpop.f32.mrf.mxu0
    %v446 = vadd.f32 %v406, %v445
    %v447 = vpop.f32.mrf.mxu0
    %v448 = vpop.f32.mrf.mxu0
    %v449 = vadd.f32 %v407, %v448
    %v450 = vpop.f32.mrf.mxu0
    %451 = vdwg.mxu0
    %vm452 = vcmask 130048
    %v453 = vsel %vm452, %v446, -inf
    %454 = vmax.xlane.f32.xlu0 %v453
    %v455 = vpop.xlane.xlu0 %454
    %v456 = vsel %vm452, %v449, -inf
    %457 = vmax.xlane.f32.xlu0 %v456
    %v458 = vpop.xlane.xlu0 %457
    %v459 = vsub.f32 %v446, %v455
    %v460 = vsub.f32 %v449, %v458
    %v461 = vmul.f32 %v459, 1.442695
    %v462 = vpow.pop %v461
    %v463 = vmul.f32 %v460, 1.442695
    %v464 = vpow.pop %v463
    %v465 = vsel %vm452, %v462, 0.0
    %466 = vadd.xlane.f32.xlu0 %v465
    %v467 = vpop.xlane.xlu0 %466
    %v468 = vsel %vm452, %v464, 0.0
    %469 = vadd.xlane.f32.xlu0 %v468
    %v470 = vpop.xlane.xlu0 %469
    %v471 = vrcp.pop %v467
    %v472 = vrcp.pop %v470
    %v473 = vmul.f32 %v462, %v471
    %v474 = vmul.f32 %v464, %v472
    %v475 = vpack.c.bf16 %v474, %v473
    %477 = vrot.lane.b32.xlu0 %v405, 96
    %v478 = vpop.permute.xlu0 %477
    %v481 = vsel %vm452, %v475, 0
    %483 = vmatprep.subr.bf16.mxu0 0
    %484 = vmatpush1.bf16.msra.mxu0 0
    %485 = vmatprep.subr.bf16.mxu0 0
    %486 = vmatpush1.bf16.msra.mxu0 0
    %487 = vmatprep.subr.bf16.mxu0 0
    %488 = vmatpush1.bf16.msra.mxu0 0
    %489 = vmatprep.subr.bf16.mxu0 0
    %490 = vmatpush1.bf16.msra.mxu0 0
    %491 = vmatprep.subr.bf16.mxu0 0
    %492 = vmatpush1.bf16.msra.mxu0 0
    %493 = vmatprep.subr.bf16.mxu0 0
    %494 = vmatpush1.bf16.msra.mxu0 0
    %495 = vmatprep.subr.bf16.mxu0 0
    %496 = vmatpush1.bf16.msra.mxu0 0
    %497 = vmatprep.subr.bf16.mxu0 0
    %498 = vmatpush1.bf16.msra.mxu0 %v478
    %499 = vmatprep.subr.bf16.mxu0 0
    %500 = vmatpush2.bf16.msra.mxu0 0
    %501 = vmatprep.subr.bf16.mxu0 0
    %502 = vmatpush2.bf16.msra.mxu0 0
    %503 = vmatprep.subr.bf16.mxu0 0
    %504 = vmatpush2.bf16.msra.mxu0 0
    %505 = vmatprep.subr.bf16.mxu0 0
    %506 = vmatpush2.bf16.msra.mxu0 0
    %507 = vmatprep.subr.bf16.mxu0 0
    %508 = vmatpush2.bf16.msra.mxu0 0
    %509 = vmatprep.subr.bf16.mxu0 0
    %510 = vmatpush2.bf16.msra.mxu0 0
    %511 = vmatprep.subr.bf16.mxu0 0
    %512 = vmatpush2.bf16.msra.mxu0 0
    %513 = vmatprep.subr.bf16.mxu0 0
    %514 = vmatpush2.bf16.msra.mxu0 0
    %515 = vmatprep.mubr.bf16.mxu0 0
    %516 = vmatmul.mubr.bf16.gmra.mxu0 %v481
    %v517 = vpop.f32.mrf.mxu0
    %v518 = vadd.f32 0.0, %v517
    %v519 = vpop.f32.mrf.mxu0
    %v520 = vpop.f32.mrf.mxu0
    %v521 = vadd.f32 0.0, %v520
    %v522 = vpop.f32.mrf.mxu0
    %523 = vdwg.mxu0
    %v524 = vadd.f32 %v345, %v518
    %v525 = vadd.f32 %v346, %v521
    %v526 = vsel %vm360, %v524, 0.0
    %527 = vadd.xlane.f32.xlu0 %v526
    %v528 = vpop.xlane.xlu0 %527
    %v529 = vsel %vm360, %v525, 0.0
    %530 = vadd.xlane.f32.xlu0 %v529
    %v531 = vpop.xlane.xlu0 %530
    %v532 = vrcp.pop 32.0
    %v533 = vmul.f32 %v528, %v532
    %v534 = vmul.f32 %v531, %v532
    %v535 = vsub.f32 %v524, %v533
    %v536 = vsub.f32 %v525, %v534
    %v537 = vmul.f32 %v535, %v535
    %v538 = vmul.f32 %v536, %v536
    %v539 = vsel %vm360, %v537, 0.0
    %540 = vadd.xlane.f32.xlu0 %v539
    %v541 = vpop.xlane.xlu0 %540
    %v542 = vsel %vm360, %v538, 0.0
    %543 = vadd.xlane.f32.xlu0 %v542
    %v544 = vpop.xlane.xlu0 %543
    %v545 = vmul.f32 %v541, %v532
    %v546 = vmul.f32 %v544, %v532
    %v547 = vadd.f32 %v545, 1e-05
    %v548 = vadd.f32 %v546, 1e-05
    %v549 = vrsqrt.pop %v547
    %v550 = vrsqrt.pop %v548
    %v551 = vmul.f32 %v535, %v549
    %v552 = vmul.f32 %v536, %v550
    %v553 = vlaneseq
    %v554 = vshrl.u32 %v553, 7
    %v555 = vsub.s32 3, %v554
    %v556 = vrot.slane %v340, %v555
    %v557 = vmul.f32 %v551, %v556
    %v558 = vmul.f32 %v552, %v556
    %v559 = vunpack.c.l.bf16 %v50
    %v560 = vlaneseq
    %v561 = vshrl.u32 %v560, 7
    %v562 = vsub.s32 4, %v561
    %v563 = vrot.slane %v559, %v562
    %v564 = vadd.f32 %v557, %v563
    %v565 = vadd.f32 %v558, %v563
    %v566 = vpack.c.bf16 %v565, %v564
    %v567 = vlaneseq
    %v568 = vshrl.u32 %v567, 7
    %v569 = vsub.s32 5, %v568
    %v570 = vrot.slane %v559, %v569
    %v575 = vunpack.c.l.b16 %v34
    %v576 = vunpack.c.l.b16 %v35
    %v577 = vunpack.c.l.b16 %v36
    %v578 = vunpack.c.l.b16 %v37
    %v579 = vpack.c.b16 %v576, %v575
    %v580 = vpack.c.b16 %v578, %v577
    %v584 = vsel %vm360, %v566, 0
    %586 = vmatprep.subr.bf16.mxu0 0
    %587 = vmatpush1.bf16.msra.mxu0 0
    %588 = vmatprep.subr.bf16.mxu0 0
    %589 = vmatpush1.bf16.msra.mxu0 0
    %590 = vmatprep.subr.bf16.mxu0 0
    %591 = vmatpush1.bf16.msra.mxu0 0
    %592 = vmatprep.subr.bf16.mxu0 0
    %593 = vmatpush1.bf16.msra.mxu0 0
    %594 = vmatprep.subr.bf16.mxu0 0
    %595 = vmatpush1.bf16.msra.mxu0 0
    %596 = vmatprep.subr.bf16.mxu0 0
    %597 = vmatpush1.bf16.msra.mxu0 0
    %598 = vmatprep.subr.bf16.mxu0 0
    %599 = vmatpush1.bf16.msra.mxu0 %v580
    %600 = vmatprep.subr.bf16.mxu0 0
    %601 = vmatpush1.bf16.msra.mxu0 %v579
    %602 = vmatprep.subr.bf16.mxu0 0
    %603 = vmatpush2.bf16.msra.mxu0 0
    %604 = vmatprep.subr.bf16.mxu0 0
    %605 = vmatpush2.bf16.msra.mxu0 0
    %606 = vmatprep.subr.bf16.mxu0 0
    %607 = vmatpush2.bf16.msra.mxu0 0
    %608 = vmatprep.subr.bf16.mxu0 0
    %609 = vmatpush2.bf16.msra.mxu0 0
    %610 = vmatprep.subr.bf16.mxu0 0
    %611 = vmatpush2.bf16.msra.mxu0 0
    %612 = vmatprep.subr.bf16.mxu0 0
    %613 = vmatpush2.bf16.msra.mxu0 0
    %614 = vmatprep.subr.bf16.mxu0 0
    %615 = vmatpush2.bf16.msra.mxu0 0
    %616 = vmatprep.subr.bf16.mxu0 0
    %617 = vmatpush2.bf16.msra.mxu0 0
    %618 = vmatprep.mubr.bf16.mxu0 0
    %619 = vmatmul.mubr.bf16.gmra.mxu0 %v584
    %v620 = vpop.f32.mrf.mxu0
    %v621 = vadd.f32 %v570, %v620
    %v622 = vpop.f32.mrf.mxu0
    %v623 = vpop.f32.mrf.mxu0
    %v624 = vadd.f32 %v570, %v623
    %v625 = vpop.f32.mrf.mxu0
    %626 = vdwg.mxu0
    %v627 = vmax.f32 %v621, 0.0
    %v628 = vmax.f32 %v624, 0.0
    %v629 = vpack.c.bf16 %v628, %v627
    %v630 = vunpack.c.l.bf16 %v51
    %v631 = vlaneseq
    %v632 = vshrl.u32 %v631, 7
    %v633 = vsub.s32 6, %v632
    %v634 = vrot.slane %v630, %v633
    %v639 = vunpack.c.l.b16 %v38
    %v640 = vunpack.c.l.b16 %v39
    %v641 = vunpack.c.l.b16 %v40
    %v642 = vunpack.c.l.b16 %v41
    %v643 = vpack.c.b16 %v640, %v639
    %v644 = vpack.c.b16 %v642, %v641
    %v648 = vsel %vm360, %v629, 0
    %650 = vmatprep.subr.bf16.mxu0 0
    %651 = vmatpush1.bf16.msra.mxu0 0
    %652 = vmatprep.subr.bf16.mxu0 0
    %653 = vmatpush1.bf16.msra.mxu0 0
    %654 = vmatprep.subr.bf16.mxu0 0
    %655 = vmatpush1.bf16.msra.mxu0 0
    %656 = vmatprep.subr.bf16.mxu0 0
    %657 = vmatpush1.bf16.msra.mxu0 0
    %658 = vmatprep.subr.bf16.mxu0 0
    %659 = vmatpush1.bf16.msra.mxu0 0
    %660 = vmatprep.subr.bf16.mxu0 0
    %661 = vmatpush1.bf16.msra.mxu0 0
    %662 = vmatprep.subr.bf16.mxu0 0
    %663 = vmatpush1.bf16.msra.mxu0 %v644
    %664 = vmatprep.subr.bf16.mxu0 0
    %665 = vmatpush1.bf16.msra.mxu0 %v643
    %666 = vmatprep.subr.bf16.mxu0 0
    %667 = vmatpush2.bf16.msra.mxu0 0
    %668 = vmatprep.subr.bf16.mxu0 0
    %669 = vmatpush2.bf16.msra.mxu0 0
    %670 = vmatprep.subr.bf16.mxu0 0
    %671 = vmatpush2.bf16.msra.mxu0 0
    %672 = vmatprep.subr.bf16.mxu0 0
    %673 = vmatpush2.bf16.msra.mxu0 0
    %674 = vmatprep.subr.bf16.mxu0 0
    %675 = vmatpush2.bf16.msra.mxu0 0
    %676 = vmatprep.subr.bf16.mxu0 0
    %677 = vmatpush2.bf16.msra.mxu0 0
    %678 = vmatprep.subr.bf16.mxu0 0
    %679 = vmatpush2.bf16.msra.mxu0 0
    %680 = vmatprep.subr.bf16.mxu0 0
    %681 = vmatpush2.bf16.msra.mxu0 0
    %682 = vmatprep.mubr.bf16.mxu0 0
    %683 = vmatmul.mubr.bf16.gmra.mxu0 %v648
    %v684 = vpop.f32.mrf.mxu0
    %v685 = vadd.f32 %v634, %v684
    %v686 = vpop.f32.mrf.mxu0
    %v687 = vpop.f32.mrf.mxu0
    %v688 = vadd.f32 %v634, %v687
    %v689 = vpop.f32.mrf.mxu0
    %690 = vdwg.mxu0
    %v691 = vadd.f32 %v564, %v685
    %v692 = vadd.f32 %v565, %v688
    %v693 = vsel %vm360, %v691, 0.0
    %694 = vadd.xlane.f32.xlu0 %v693
    %v695 = vpop.xlane.xlu0 %694
    %v696 = vsel %vm360, %v692, 0.0
    %697 = vadd.xlane.f32.xlu0 %v696
    %v698 = vpop.xlane.xlu0 %697
    %v699 = vmul.f32 %v695, %v532
    %v700 = vmul.f32 %v698, %v532
    %v701 = vsub.f32 %v691, %v699
    %v702 = vsub.f32 %v692, %v700
    %v703 = vmul.f32 %v701, %v701
    %v704 = vmul.f32 %v702, %v702
    %v705 = vsel %vm360, %v703, 0.0
    %706 = vadd.xlane.f32.xlu0 %v705
    %v707 = vpop.xlane.xlu0 %706
    %v708 = vsel %vm360, %v704, 0.0
    %709 = vadd.xlane.f32.xlu0 %v708
    %v710 = vpop.xlane.xlu0 %709
    %v711 = vmul.f32 %v707, %v532
    %v712 = vmul.f32 %v710, %v532
    %v713 = vadd.f32 %v711, 1e-05
    %v714 = vadd.f32 %v712, 1e-05
    %v715 = vrsqrt.pop %v713
    %v716 = vrsqrt.pop %v714
    %v717 = vmul.f32 %v701, %v715
    %v718 = vmul.f32 %v702, %v716
    %v719 = vlaneseq
    %v720 = vshrl.u32 %v719, 7
    %v721 = vsub.s32 7, %v720
    %v722 = vrot.slane %v630, %v721
    %v723 = vmul.f32 %v717, %v722
    %v724 = vmul.f32 %v718, %v722
    %v725 = vunpack.c.l.bf16 %v52
    %v726 = vlaneseq
    %v727 = vshrl.u32 %v726, 7
    %v728 = vsub.s32 0, %v727
    %v729 = vrot.slane %v725, %v728
    %v730 = vadd.f32 %v723, %v729
    %v731 = vadd.f32 %v724, %v729
    %v732 = vmax.f32 %v730, 0.0
    %v733 = vmax.f32 %v731, 0.0
    %v734 = vunpack.c.l.bf16 %v42
    %v735 = vunpack.c.l.bf16 %v43
    %v736 = vmul.f32 %v732, %v734
    %v737 = vmul.f32 %v733, %v735
    %v738 = vsel %vm360, %v736, 0.0
    %739 = vadd.xlane.f32.xlu0 %v738
    %v740 = vpop.xlane.xlu0 %739
    %v741 = vsel %vm360, %v737, 0.0
    %742 = vadd.xlane.f32.xlu0 %v741
    %v743 = vpop.xlane.xlu0 %742
    %v744 = vunpack.c.l.bf16 %v44
    %v745 = vunpack.c.l.bf16 %v45
    %v746 = vmul.f32 %v740, %v744
    %v747 = vmul.f32 %v743, %v745
    %vm748 = vcmask 15360
    %v749 = vsel %vm748, %v746, 0.0
    %v750 = vsel %vm748, %v747, 0.0
    %v751 = vadd.f32 %v749, %v750
    %v752 = vrot.slane %v751, 4
    %v753 = vadd.f32 %v751, %v752
    %v754 = vrot.slane %v753, 2
    %v755 = vadd.f32 %v753, %v754
    %v756 = vrot.slane %v755, 1
    %v757 = vadd.f32 %v755, %v756
    %759 = vset.pattern.permute.xlu0 0
    %760 = vperm.xlu0 %759, %v725
    %v761 = vpop.permute.xlu0 %760
    %v763 = vadd.f32 %v757, %v761
    %vm764 = vcmask 9217
    %765 = vst.msk [vmem:[#allocation5 - $0x1] sm:$0x2] %vm764, %v763
    // Predicated region
    $region14: #{tpu_custom_call.1} parent=1 // pred_check
      _
    $region15: #{tpu_custom_call.1} parent=1 // pred_check_branch
      %767 = sbr.rel (0) target = $region17
    $region16: #{tpu_custom_call.1} parent=1 // pred_region
      %s769 = ssub.s32 16, 16
      %770 = vsyncadd [#allocation4], %s769
      %s772 = sshll.u32 [#allocation5], 4
      %s773 = int_to_ptr.vmem [resolvable:$true] %s772
      %775 = dma.vmem_to_hbm [thread:$0]  %s773, 16, %s2, [#allocation4]
    $region17: #{tpu_custom_call.1} parent=1 // pred_fallthru
      _
    // Predicated region
    $region18: #{tpu_custom_call.1} parent=1 // pred_check
      _
    $region19: #{tpu_custom_call.1} parent=1 // pred_check_branch
      %777 = sbr.rel (0) target = $region21
    $region20: #{tpu_custom_call.1} parent=1 // pred_region
      %778 = dma.done [#allocation4], 16
    $region21: #{tpu_custom_call.1} parent=1 // pred_fallthru
      _
    %779 = vsyncpa [#allocation3], 1
    %780 = vsyncpa [#allocation4], 1

</llo_original>
